<compile_context>
chip_gen: v5e
topology: v5e:2x2
jax: 0.10.0
libtpu: 0.0.40
codegen_flags: <defaults>
</compile_context>

<pallas_src>
import functools

import jax
import jax.numpy as jnp
from jax.experimental import pallas as pl
from jax.experimental.pallas import tpu as pltpu

IN_FEATURES = 512
OUT_FEATURES = 512


def _linear_kernel(x_ref, w_ref, b_ref, o_ref):
    # x_ref: (TM, K) f32   w_ref: (K, TN) bf16   b_ref: (1, TN) f32   o_ref: (TM, TN) f32
    x = x_ref[...].astype(w_ref.dtype)          # bf16 MXU operand, f32 accumulate
    acc = jnp.dot(x, w_ref[...], preferred_element_type=jnp.float32)
    o_ref[...] = (acc + b_ref[...]).astype(o_ref.dtype)


def prepare_params(weight, bias, param_dtype=jnp.bfloat16):
    """One-time parameter prep (keep transpose/cast OUT of the per-call path).

    weight: (OUT_FEATURES, IN_FEATURES) PyTorch Linear layout
    bias:   (OUT_FEATURES,)
    Returns (w_t, b2d): w_t (K, N) lane-dense in `param_dtype`, b2d (1, N) f32.
    """
    w_t = jnp.asarray(weight).T.astype(param_dtype)
    b2d = jnp.asarray(bias).reshape(1, -1).astype(jnp.float32)
    return w_t, b2d


@functools.partial(jax.jit, static_argnames=("tm", "n_splits"))
def fc_forward(x, w_t, b2d, *, tm=1024, n_splits=1):
    """Forward pass of the FC TorchModel: y = x @ W.T + b.

    Args:
      x:        (B, IN_FEATURES) float32
      w_t:      (IN_FEATURES, OUT_FEATURES) pre-transposed weight (bf16 from
                prepare_params).
      b2d:      (1, OUT_FEATURES) float32
      tm:       max batch tile height (M tiling for large B); capped at 2048 so
                double-buffered tiles fit v7x's smaller VMEM.
      n_splits: split of the output-feature axis. Keep 1 on v5e/v6e.  Set 2 on
                v7x for the small-batch latency path so both TensorCores are
                active (each fetches half the weight).  For large B keep 1 and
                let the parallel M axis shard across cores.
    Returns:
      (B, OUT_FEATURES) float32
    """
    B, K = x.shape
    N = w_t.shape[1]
    assert K == IN_FEATURES and N == OUT_FEATURES
    assert N % n_splits == 0
    tn = N // n_splits

    # Batch tile: single full-extent block for small B (any B allowed when the
    # block equals the array dim), otherwise a multiple-of-8 tile with a ragged
    # (masked) last tile -- no padding, no extra copy of x.
    tm_eff = min(tm, 2048)
    if tm_eff >= B:
        tm_eff = B
    else:
        tm_eff = max(8, (tm_eff // 8) * 8)

    m_tiles = pl.cdiv(B, tm_eff)
    # Outer axis = N split (weight block index constant across inner M tiles,
    # so the weight half stays VMEM-resident); inner axis = M tiles (streamed).
    grid = (n_splits, m_tiles)

    w_itemsize = jnp.dtype(w_t.dtype).itemsize
    cost = pl.CostEstimate(
        flops=2 * B * K * N,
        transcendentals=0,
        bytes_accessed=(n_splits * B * K * 4        # x read once per N split
                        + K * N * w_itemsize        # weight read once total
                        + n_splits * N * 4          # bias
                        + B * N * 4),               # output write
    )

    # VMEM footprint (double-buffered x/out/weight) + margin for internal
    # scratch; keeps tm>512 compiling under v5e's 16 MiB default scoped limit
    # while staying far below v7x's 64 MiB physical VMEM.
    vmem_need = (2 * tm_eff * K * 4
                 + 2 * tm_eff * tn * 4
                 + 2 * K * tn * w_itemsize
                 + 2 * tn * 4)
    vmem_limit = min(int(vmem_need) + (8 << 20), 48 << 20)

    out = pl.pallas_call(
        _linear_kernel,
        out_shape=jax.ShapeDtypeStruct((B, N), jnp.float32),
        grid=grid,
        in_specs=[
            pl.BlockSpec((tm_eff, K), lambda j, i: (i, 0)),  # x: batch tile (streamed)
            pl.BlockSpec((K, tn), lambda j, i: (0, j)),      # w_t: resident per split
            pl.BlockSpec((1, tn), lambda j, i: (0, j)),      # bias tile
        ],
        out_specs=pl.BlockSpec((tm_eff, tn), lambda j, i: (i, j)),
        compiler_params=pltpu.CompilerParams(
            dimension_semantics=("parallel", "parallel"),
            vmem_limit_bytes=vmem_limit,
        ),
        cost_estimate=cost,
    )(x, w_t, b2d)

    return out


def fc_forward_ref(x, weight, bias):
    # Pure-JAX reference matching torch.nn.Linear semantics (f32).
    return x @ weight.T + bias


if __name__ == "__main__":
    key = jax.random.PRNGKey(0)
    kx, kw, kb = jax.random.split(key, 3)

    batch = 8
    x = jax.random.normal(kx, (batch, IN_FEATURES), dtype=jnp.float32)

    # Deterministic parameter init (PyTorch-Linear-style bound 1/sqrt(fan_in)).
    bound = 1.0 / (IN_FEATURES ** 0.5)
    weight = jax.random.uniform(
        kw, (OUT_FEATURES, IN_FEATURES), minval=-bound, maxval=bound, dtype=jnp.float32
    )
    bias = jax.random.uniform(
        kb, (OUT_FEATURES,), minval=-bound, maxval=bound, dtype=jnp.float32
    )

    # Parameter prep happens ONCE, outside the hot path (transpose + bf16 cast).
    w_t, b2d = prepare_params(weight, bias)
    w_t, b2d = jax.block_until_ready((w_t, b2d))

    # bf16 weights => loosen tolerances vs the f32 reference.
    ATOL = 2e-2
    RTOL = 2e-2

    # Small-batch / latency path (single full-extent block).
    y = jax.block_until_ready(fc_forward(x, w_t, b2d))
    y_ref = fc_forward_ref(x, weight, bias)
    assert y.shape == (batch, OUT_FEATURES)
    assert jnp.allclose(y, y_ref, atol=ATOL, rtol=RTOL)

    # Large-batch / M-tiled path with a ragged last tile (1030 = 1024 + 6).
    big = jax.random.normal(kx, (1030, IN_FEATURES), dtype=jnp.float32)
    y_big = jax.block_until_ready(fc_forward(big, w_t, b2d))
    assert y_big.shape == (1030, OUT_FEATURES)
    assert jnp.allclose(y_big, fc_forward_ref(big, weight, bias), atol=ATOL, rtol=RTOL)

    # n_splits=2 path (v7x small-batch latency mode; correct on all gens).
    y_split = jax.block_until_ready(fc_forward(x, w_t, b2d, n_splits=2))
    assert jnp.allclose(y_split, y_ref, atol=ATOL, rtol=RTOL)

    # TODO(synk): TorchModel itself is an abstract base class; only the documented
    # FC(512, 512) forward example has concrete compute to translate. Methods like
    # to_predictions / state serialization / dataset transforms / collate_fn are
    # host-side glue with no kernel equivalent.
    print("KERNEL_OK")
</pallas_src>

<mosaic_0001>
module attributes {stable_mosaic.version = 11 : i64} {
  func.func @_linear_kernel(%arg0: i32, %arg1: i32, %arg2: memref<8x512xf32, #tpu.memory_space<vmem>>, %arg3: memref<512x512xbf16, #tpu.memory_space<vmem>>, %arg4: memref<1x512xf32, #tpu.memory_space<vmem>>, %arg5: memref<8x512xf32, #tpu.memory_space<vmem>>) attributes {dimension_semantics = [#tpu.dimension_semantics<parallel>, #tpu.dimension_semantics<parallel>], iteration_bounds = array<i64: 1, 1>, scalar_prefetch = 0 : i64, scratch_operands = 0 : i64, tpu.core_type = #tpu.core_type<tc>, window_params = [{transform_indices = @transform_0, window_bounds = array<i64: 8, 512>}, {transform_indices = @transform_1, window_bounds = array<i64: 512, 512>}, {transform_indices = @transform_2, window_bounds = array<i64: 1, 512>}, {transform_indices = @transform_3, window_bounds = array<i64: 8, 512>}]} {
    %c0 = arith.constant 0 : index
    %c0_0 = arith.constant 0 : index
    %0 = vector.load %arg2[%c0, %c0_0] : memref<8x512xf32, #tpu.memory_space<vmem>>, vector<8x512xf32>
    %1 = arith.truncf %0 : vector<8x512xf32> to vector<8x512xbf16>
    %c0_1 = arith.constant 0 : index
    %c0_2 = arith.constant 0 : index
    %2 = vector.load %arg3[%c0_1, %c0_2] : memref<512x512xbf16, #tpu.memory_space<vmem>>, vector<512x512xbf16>
    %cst = arith.constant dense<0.000000e+00> : vector<8x512xf32>
    %3 = tpu.matmul %1, %2, %cst {dimension_numbers = #tpu.dot_dimension_numbers<[1], [0], [0], [1], [0, 0, 1, 1], [], []>} : vector<8x512xbf16>, vector<512x512xbf16>, vector<8x512xf32> -> vector<8x512xf32>
    %c0_3 = arith.constant 0 : index
    %c0_4 = arith.constant 0 : index
    %4 = vector.load %arg4[%c0_3, %c0_4] : memref<1x512xf32, #tpu.memory_space<vmem>>, vector<1x512xf32>
    %5 = vector.broadcast %4 : vector<1x512xf32> to vector<8x512xf32>
    %6 = arith.addf %3, %5 : vector<8x512xf32>
    %c0_5 = arith.constant 0 : index
    %c0_6 = arith.constant 0 : index
    %7 = vector.load %arg5[%c0_5, %c0_6] : memref<8x512xf32, #tpu.memory_space<vmem>>, vector<8x512xf32>
    tpu.vector_store %arg5[%c0_5, %c0_6], %6 {strides = array<i32>} : memref<8x512xf32, #tpu.memory_space<vmem>>, vector<8x512xf32>,
    return
  }
  func.func @transform_0(%arg0: i32, %arg1: i32) -> (i32, i32) {
    %c0_i32 = arith.constant 0 : i32
    %c0_i32_0 = arith.constant 0 : i32
    return %arg1, %c0_i32 : i32, i32
  }
  func.func @transform_1(%arg0: i32, %arg1: i32) -> (i32, i32) {
    %c0_i32 = arith.constant 0 : i32
    %c0_i32_0 = arith.constant 0 : i32
    return %c0_i32, %arg0 : i32, i32
  }
  func.func @transform_2(%arg0: i32, %arg1: i32) -> (i32, i32) {
    %c0_i32 = arith.constant 0 : i32
    %c0_i32_0 = arith.constant 0 : i32
    return %c0_i32, %arg0 : i32, i32
  }
  func.func @transform_3(%arg0: i32, %arg1: i32) -> (i32, i32) {
    %c0_i32 = arith.constant 0 : i32
    return %arg1, %arg0 : i32, i32
  }
}

</mosaic_0001>

<llo_original>
// kernel: fc_forward.1
$region0: #{fc_forward.1}
  #allocation0 [shape = 'u32[]', space=smem, size = 0x4, offset = 0x4, fixed_abs, tag = 'smem constant byte address 0x4 - core index']
  #allocation1 [shape = 'u32[72,128]{1,0:T(1,128)}', space=vmem, size = 0x9000, scoped, tag = 'internal scratch']
  %s0 = inlined_call_operand.hbm [shape: f32[8,512], index: 0, kind: input, shape index: {}]
  %s1 = inlined_call_operand.hbm [shape: bf16[512,512], index: 1, kind: input, shape index: {}]
  %s2 = inlined_call_operand.hbm [shape: f32[1,512], index: 2, kind: input, shape index: {}]
  %s3 = inlined_call_operand.hbm [shape: f32[8,512], index: 3, kind: output, shape index: {}]
  %s4 = sld [smem:[#allocation0]]
  $region34: #{fc_forward.1} parent=0
    _
  %s6 = ssub.s32 1, %s4
  %s7 = scalar_select 0, %s6, %s4
  $region1: #{fc_forward.1} parent=0
    #allocation2 [shape = 'u8[16384]{0}', space=vmem, size = 0x4000, scoped, tag = 'input window, operand 0, single buffered']
    #allocation3 [shape = 's32[1]{0}', space=sflag, size = 0x4, scoped, tag = 'scoped memory for fc_forward.1']
    #allocation4 [shape = 's32[1]{0}', space=sflag, size = 0x4, scoped, tag = 'scoped memory for fc_forward.1']
    #allocation5 [shape = 'u8[524288]{0}', space=vmem, size = 0x80000, scoped, tag = 'input window, operand 1, single buffered']
    #allocation6 [shape = 's32[1]{0}', space=sflag, size = 0x4, scoped, tag = 'scoped memory for fc_forward.1']
    #allocation7 [shape = 'u8[2048]{0}', space=vmem, size = 0x800, scoped, tag = 'input window, operand 2, single buffered']
    #allocation8 [shape = 'u8[16384]{0}', space=vmem, size = 0x4000, scoped, tag = 'output window, operand 0, single buffered']
    %8 = vsyncpa [#allocation3], 0
    %9 = vsyncpa [#allocation6], 0
    %10 = vsyncpa [#allocation4], 0
    // Predicated region
    $region2: #{fc_forward.1} parent=1 // pred_check
      _
    $region3: #{fc_forward.1} parent=1 // pred_check_branch
      %12 = sbr.rel (0) target = $region5
    $region4: #{fc_forward.1} parent=1 // pred_region
      %14 = vsyncadd [#allocation3], 0
      %s16 = sshll.u32 %s0, 4
      %s17 = int_to_ptr.hbm [resolvable:$true] %s16
      %s18 = sshll.u32 [#allocation2], 4
      %s19 = int_to_ptr.vmem [resolvable:$true] %s18
      %21 = dma.hbm_to_vmem [thread:$0]  %s17, 512, %s19, [#allocation3]
    $region5: #{fc_forward.1} parent=1 // pred_fallthru
      _
    // Predicated region
    $region6: #{fc_forward.1} parent=1 // pred_check
      _
    $region7: #{fc_forward.1} parent=1 // pred_check_branch
      %23 = sbr.rel (0) target = $region9
    $region8: #{fc_forward.1} parent=1 // pred_region
      %25 = vsyncadd [#allocation6], 0
      %s26 = sshll.u32 %s1, 4
      %s27 = int_to_ptr.hbm [resolvable:$true] %s26
      %s28 = sshll.u32 [#allocation5], 4
      %s29 = int_to_ptr.vmem [resolvable:$true] %s28
      %34 = dma.hbm_to_vmem [thread:$0]  %s27, 16384, %s29, [#allocation6], 256, 256, 16
    $region9: #{fc_forward.1} parent=1 // pred_fallthru
      _
    // Predicated region
    $region10: #{fc_forward.1} parent=1 // pred_check
      _
    $region11: #{fc_forward.1} parent=1 // pred_check_branch
      %36 = sbr.rel (0) target = $region13
    $region12: #{fc_forward.1} parent=1 // pred_region
      %38 = vsyncadd [#allocation6], 0
      %s40 = sshll.u32 %s2, 4
      %s41 = int_to_ptr.hbm [resolvable:$true] %s40
      %s42 = sshll.u32 [#allocation7], 4
      %s43 = int_to_ptr.vmem [resolvable:$true] %s42
      %45 = dma.hbm_to_vmem [thread:$0]  %s41, 64, %s43, [#allocation6]
    $region13: #{fc_forward.1} parent=1 // pred_fallthru
      _
    // Predicated region
    $region14: #{fc_forward.1} parent=1 // pred_check
      _
    $region15: #{fc_forward.1} parent=1 // pred_check_branch
      %47 = sbr.rel (0) target = $region17
    $region16: #{fc_forward.1} parent=1 // pred_region
      %49 = dma.done [#allocation3], 512
    $region17: #{fc_forward.1} parent=1 // pred_fallthru
      _
    // Predicated region
    $region18: #{fc_forward.1} parent=1 // pred_check
      _
    $region19: #{fc_forward.1} parent=1 // pred_check_branch
      %51 = sbr.rel (0) target = $region21
    $region20: #{fc_forward.1} parent=1 // pred_region
      %53 = dma.done [#allocation6], 16384
    $region21: #{fc_forward.1} parent=1 // pred_fallthru
      _
    // Predicated region
    $region22: #{fc_forward.1} parent=1 // pred_check
      _
    $region23: #{fc_forward.1} parent=1 // pred_check_branch
      %55 = sbr.rel (0) target = $region25
    $region24: #{fc_forward.1} parent=1 // pred_region
      %57 = dma.done [#allocation6], 64
    $region25: #{fc_forward.1} parent=1 // pred_fallthru
      _
    %v58 = vld [vmem:[#allocation2] sm:$0xff]
    %v59 = vld [vmem:[#allocation2 + $0x8] sm:$0xff]
    %v60 = vld [vmem:[#allocation2 + $0x10] sm:$0xff]
    %v61 = vld [vmem:[#allocation2 + $0x18] sm:$0xff]
    %v62 = vpack.c.bf16 %v58, %v58
    %v63 = vpack.c.bf16 %v59, %v59
    %v64 = vpack.c.bf16 %v60, %v60
    %v65 = vpack.c.bf16 %v61, %v61
    %v66 = vld [vmem:[#allocation5] sm:$0xff]
    %v67 = vld [vmem:[#allocation5 + $0x8] sm:$0xff]
    %v68 = vld [vmem:[#allocation5 + $0x10] sm:$0xff]
    %v69 = vld [vmem:[#allocation5 + $0x18] sm:$0xff]
    %v70 = vld [vmem:[#allocation5 + $0x20] sm:$0xff]
    %v71 = vld [vmem:[#allocation5 + $0x28] sm:$0xff]
    %v72 = vld [vmem:[#allocation5 + $0x30] sm:$0xff]
    %v73 = vld [vmem:[#allocation5 + $0x38] sm:$0xff]
    %v74 = vld [vmem:[#allocation5 + $0x40] sm:$0xff]
    %v75 = vld [vmem:[#allocation5 + $0x48] sm:$0xff]
    %v76 = vld [vmem:[#allocation5 + $0x50] sm:$0xff]
    %v77 = vld [vmem:[#allocation5 + $0x58] sm:$0xff]
    %v78 = vld [vmem:[#allocation5 + $0x60] sm:$0xff]
    %v79 = vld [vmem:[#allocation5 + $0x68] sm:$0xff]
    %v80 = vld [vmem:[#allocation5 + $0x70] sm:$0xff]
    %v81 = vld [vmem:[#allocation5 + $0x78] sm:$0xff]
    %v82 = vld [vmem:[#allocation5 + $0x80] sm:$0xff]
    %v83 = vld [vmem:[#allocation5 + $0x88] sm:$0xff]
    %v84 = vld [vmem:[#allocation5 + $0x90] sm:$0xff]
    %v85 = vld [vmem:[#allocation5 + $0x98] sm:$0xff]
    %v86 = vld [vmem:[#allocation5 + $0xa0] sm:$0xff]
    %v87 = vld [vmem:[#allocation5 + $0xa8] sm:$0xff]
    %v88 = vld [vmem:[#allocation5 + $0xb0] sm:$0xff]
    %v89 = vld [vmem:[#allocation5 + $0xb8] sm:$0xff]
    %v90 = vld [vmem:[#allocation5 + $0xc0] sm:$0xff]
    %v91 = vld [vmem:[#allocation5 + $0xc8] sm:$0xff]
    %v92 = vld [vmem:[#allocation5 + $0xd0] sm:$0xff]
    %v93 = vld [vmem:[#allocation5 + $0xd8] sm:$0xff]
    %v94 = vld [vmem:[#allocation5 + $0xe0] sm:$0xff]
    %v95 = vld [vmem:[#allocation5 + $0xe8] sm:$0xff]
    %v96 = vld [vmem:[#allocation5 + $0xf0] sm:$0xff]
    %v97 = vld [vmem:[#allocation5 + $0xf8] sm:$0xff]
    %v98 = vld [vmem:[#allocation5 + $0x100] sm:$0xff]
    %v99 = vld [vmem:[#allocation5 + $0x108] sm:$0xff]
    %v100 = vld [vmem:[#allocation5 + $0x110] sm:$0xff]
    %v101 = vld [vmem:[#allocation5 + $0x118] sm:$0xff]
    %v102 = vld [vmem:[#allocation5 + $0x120] sm:$0xff]
    %v103 = vld [vmem:[#allocation5 + $0x128] sm:$0xff]
    %v104 = vld [vmem:[#allocation5 + $0x130] sm:$0xff]
    %v105 = vld [vmem:[#allocation5 + $0x138] sm:$0xff]
    %v106 = vld [vmem:[#allocation5 + $0x140] sm:$0xff]
    %v107 = vld [vmem:[#allocation5 + $0x148] sm:$0xff]
    %v108 = vld [vmem:[#allocation5 + $0x150] sm:$0xff]
    %v109 = vld [vmem:[#allocation5 + $0x158] sm:$0xff]
    %v110 = vld [vmem:[#allocation5 + $0x160] sm:$0xff]
    %v111 = vld [vmem:[#allocation5 + $0x168] sm:$0xff]
    %v112 = vld [vmem:[#allocation5 + $0x170] sm:$0xff]
    %v113 = vld [vmem:[#allocation5 + $0x178] sm:$0xff]
    %v114 = vld [vmem:[#allocation5 + $0x180] sm:$0xff]
    %v115 = vld [vmem:[#allocation5 + $0x188] sm:$0xff]
    %v116 = vld [vmem:[#allocation5 + $0x190] sm:$0xff]
    %v117 = vld [vmem:[#allocation5 + $0x198] sm:$0xff]
    %v118 = vld [vmem:[#allocation5 + $0x1a0] sm:$0xff]
    %v119 = vld [vmem:[#allocation5 + $0x1a8] sm:$0xff]
    %v120 = vld [vmem:[#allocation5 + $0x1b0] sm:$0xff]
    %v121 = vld [vmem:[#allocation5 + $0x1b8] sm:$0xff]
    %v122 = vld [vmem:[#allocation5 + $0x1c0] sm:$0xff]
    %v123 = vld [vmem:[#allocation5 + $0x1c8] sm:$0xff]
    %v124 = vld [vmem:[#allocation5 + $0x1d0] sm:$0xff]
    %v125 = vld [vmem:[#allocation5 + $0x1d8] sm:$0xff]
    %v126 = vld [vmem:[#allocation5 + $0x1e0] sm:$0xff]
    %v127 = vld [vmem:[#allocation5 + $0x1e8] sm:$0xff]
    %v128 = vld [vmem:[#allocation5 + $0x1f0] sm:$0xff]
    %v129 = vld [vmem:[#allocation5 + $0x1f8] sm:$0xff]
    %v130 = vld [vmem:[#allocation5 + $0x200] sm:$0xff]
    %v131 = vld [vmem:[#allocation5 + $0x208] sm:$0xff]
    %v132 = vld [vmem:[#allocation5 + $0x210] sm:$0xff]
    %v133 = vld [vmem:[#allocation5 + $0x218] sm:$0xff]
    %v134 = vld [vmem:[#allocation5 + $0x220] sm:$0xff]
    %v135 = vld [vmem:[#allocation5 + $0x228] sm:$0xff]
    %v136 = vld [vmem:[#allocation5 + $0x230] sm:$0xff]
    %v137 = vld [vmem:[#allocation5 + $0x238] sm:$0xff]
    %v138 = vld [vmem:[#allocation5 + $0x240] sm:$0xff]
    %v139 = vld [vmem:[#allocation5 + $0x248] sm:$0xff]
    %v140 = vld [vmem:[#allocation5 + $0x250] sm:$0xff]
    %v141 = vld [vmem:[#allocation5 + $0x258] sm:$0xff]
    %v142 = vld [vmem:[#allocation5 + $0x260] sm:$0xff]
    %v143 = vld [vmem:[#allocation5 + $0x268] sm:$0xff]
    %v144 = vld [vmem:[#allocation5 + $0x270] sm:$0xff]
    %v145 = vld [vmem:[#allocation5 + $0x278] sm:$0xff]
    %v146 = vld [vmem:[#allocation5 + $0x280] sm:$0xff]
    %v147 = vld [vmem:[#allocation5 + $0x288] sm:$0xff]
    %v148 = vld [vmem:[#allocation5 + $0x290] sm:$0xff]
    %v149 = vld [vmem:[#allocation5 + $0x298] sm:$0xff]
    %v150 = vld [vmem:[#allocation5 + $0x2a0] sm:$0xff]
    %v151 = vld [vmem:[#allocation5 + $0x2a8] sm:$0xff]
    %v152 = vld [vmem:[#allocation5 + $0x2b0] sm:$0xff]
    %v153 = vld [vmem:[#allocation5 + $0x2b8] sm:$0xff]
    %v154 = vld [vmem:[#allocation5 + $0x2c0] sm:$0xff]
    %v155 = vld [vmem:[#allocation5 + $0x2c8] sm:$0xff]
    %v156 = vld [vmem:[#allocation5 + $0x2d0] sm:$0xff]
    %v157 = vld [vmem:[#allocation5 + $0x2d8] sm:$0xff]
    %v158 = vld [vmem:[#allocation5 + $0x2e0] sm:$0xff]
    %v159 = vld [vmem:[#allocation5 + $0x2e8] sm:$0xff]
    %v160 = vld [vmem:[#allocation5 + $0x2f0] sm:$0xff]
    %v161 = vld [vmem:[#allocation5 + $0x2f8] sm:$0xff]
    %v162 = vld [vmem:[#allocation5 + $0x300] sm:$0xff]
    %v163 = vld [vmem:[#allocation5 + $0x308] sm:$0xff]
    %v164 = vld [vmem:[#allocation5 + $0x310] sm:$0xff]
    %v165 = vld [vmem:[#allocation5 + $0x318] sm:$0xff]
    %v166 = vld [vmem:[#allocation5 + $0x320] sm:$0xff]
    %v167 = vld [vmem:[#allocation5 + $0x328] sm:$0xff]
    %v168 = vld [vmem:[#allocation5 + $0x330] sm:$0xff]
    %v169 = vld [vmem:[#allocation5 + $0x338] sm:$0xff]
    %v170 = vld [vmem:[#allocation5 + $0x340] sm:$0xff]
    %v171 = vld [vmem:[#allocation5 + $0x348] sm:$0xff]
    %v172 = vld [vmem:[#allocation5 + $0x350] sm:$0xff]
    %v173 = vld [vmem:[#allocation5 + $0x358] sm:$0xff]
    %v174 = vld [vmem:[#allocation5 + $0x360] sm:$0xff]
    %v175 = vld [vmem:[#allocation5 + $0x368] sm:$0xff]
    %v176 = vld [vmem:[#allocation5 + $0x370] sm:$0xff]
    %v177 = vld [vmem:[#allocation5 + $0x378] sm:$0xff]
    %v178 = vld [vmem:[#allocation5 + $0x380] sm:$0xff]
    %v179 = vld [vmem:[#allocation5 + $0x388] sm:$0xff]
    %v180 = vld [vmem:[#allocation5 + $0x390] sm:$0xff]
    %v181 = vld [vmem:[#allocation5 + $0x398] sm:$0xff]
    %v182 = vld [vmem:[#allocation5 + $0x3a0] sm:$0xff]
    %v183 = vld [vmem:[#allocation5 + $0x3a8] sm:$0xff]
    %v184 = vld [vmem:[#allocation5 + $0x3b0] sm:$0xff]
    %v185 = vld [vmem:[#allocation5 + $0x3b8] sm:$0xff]
    %v186 = vld [vmem:[#allocation5 + $0x3c0] sm:$0xff]
    %v187 = vld [vmem:[#allocation5 + $0x3c8] sm:$0xff]
    %v188 = vld [vmem:[#allocation5 + $0x3d0] sm:$0xff]
    %v189 = vld [vmem:[#allocation5 + $0x3d8] sm:$0xff]
    %v190 = vld [vmem:[#allocation5 + $0x3e0] sm:$0xff]
    %v191 = vld [vmem:[#allocation5 + $0x3e8] sm:$0xff]
    %v192 = vld [vmem:[#allocation5 + $0x3f0] sm:$0xff]
    %v193 = vld [vmem:[#allocation5 + $0x3f8] sm:$0xff]
    %v194 = vld [vmem:[#allocation7] sm:$0xf]
    %v196 = vperm.slane %v194, 0
    %v197 = vperm.slane %v194, 1
    %v198 = vperm.slane %v194, 2
    %v199 = vperm.slane %v194, 3
    %v332 = vunpack.c.l.b16 %v66
    %v333 = vunpack.c.h.b16 %v66
    %v334 = vunpack.c.l.b16 %v67
    %v335 = vunpack.c.h.b16 %v67
    %v336 = vunpack.c.l.b16 %v68
    %v337 = vunpack.c.h.b16 %v68
    %v338 = vunpack.c.l.b16 %v69
    %v339 = vunpack.c.h.b16 %v69
    %v340 = vunpack.c.l.b16 %v70
    %v341 = vunpack.c.h.b16 %v70
    %v342 = vunpack.c.l.b16 %v71
    %v343 = vunpack.c.h.b16 %v71
    %v344 = vunpack.c.l.b16 %v72
    %v345 = vunpack.c.h.b16 %v72
    %v346 = vunpack.c.l.b16 %v73
    %v347 = vunpack.c.h.b16 %v73
    %v348 = vunpack.c.l.b16 %v74
    %v349 = vunpack.c.h.b16 %v74
    %v350 = vunpack.c.l.b16 %v75
    %v351 = vunpack.c.h.b16 %v75
    %v352 = vunpack.c.l.b16 %v76
    %v353 = vunpack.c.h.b16 %v76
    %v354 = vunpack.c.l.b16 %v77
    %v355 = vunpack.c.h.b16 %v77
    %v356 = vunpack.c.l.b16 %v78
    %v357 = vunpack.c.h.b16 %v78
    %v358 = vunpack.c.l.b16 %v79
    %v359 = vunpack.c.h.b16 %v79
    %v360 = vunpack.c.l.b16 %v80
    %v361 = vunpack.c.h.b16 %v80
    %v362 = vunpack.c.l.b16 %v81
    %v363 = vunpack.c.h.b16 %v81
    %v364 = vunpack.c.l.b16 %v82
    %v365 = vunpack.c.h.b16 %v82
    %v366 = vunpack.c.l.b16 %v83
    %v367 = vunpack.c.h.b16 %v83
    %v368 = vunpack.c.l.b16 %v84
    %v369 = vunpack.c.h.b16 %v84
    %v370 = vunpack.c.l.b16 %v85
    %v371 = vunpack.c.h.b16 %v85
    %v372 = vunpack.c.l.b16 %v86
    %v373 = vunpack.c.h.b16 %v86
    %v374 = vunpack.c.l.b16 %v87
    %v375 = vunpack.c.h.b16 %v87
    %v376 = vunpack.c.l.b16 %v88
    %v377 = vunpack.c.h.b16 %v88
    %v378 = vunpack.c.l.b16 %v89
    %v379 = vunpack.c.h.b16 %v89
    %v380 = vunpack.c.l.b16 %v90
    %v381 = vunpack.c.h.b16 %v90
    %v382 = vunpack.c.l.b16 %v91
    %v383 = vunpack.c.h.b16 %v91
    %v384 = vunpack.c.l.b16 %v92
    %v385 = vunpack.c.h.b16 %v92
    %v386 = vunpack.c.l.b16 %v93
    %v387 = vunpack.c.h.b16 %v93
    %v388 = vunpack.c.l.b16 %v94
    %v389 = vunpack.c.h.b16 %v94
    %v390 = vunpack.c.l.b16 %v95
    %v391 = vunpack.c.h.b16 %v95
    %v392 = vunpack.c.l.b16 %v96
    %v393 = vunpack.c.h.b16 %v96
    %v394 = vunpack.c.l.b16 %v97
    %v395 = vunpack.c.h.b16 %v97
    %v396 = vunpack.c.l.b16 %v98
    %v397 = vunpack.c.h.b16 %v98
    %v398 = vunpack.c.l.b16 %v99
    %v399 = vunpack.c.h.b16 %v99
    %v400 = vunpack.c.l.b16 %v100
    %v401 = vunpack.c.h.b16 %v100
    %v402 = vunpack.c.l.b16 %v101
    %v403 = vunpack.c.h.b16 %v101
    %v404 = vunpack.c.l.b16 %v102
    %v405 = vunpack.c.h.b16 %v102
    %v406 = vunpack.c.l.b16 %v103
    %v407 = vunpack.c.h.b16 %v103
    %v408 = vunpack.c.l.b16 %v104
    %v409 = vunpack.c.h.b16 %v104
    %v410 = vunpack.c.l.b16 %v105
    %v411 = vunpack.c.h.b16 %v105
    %v412 = vunpack.c.l.b16 %v106
    %v413 = vunpack.c.h.b16 %v106
    %v414 = vunpack.c.l.b16 %v107
    %v415 = vunpack.c.h.b16 %v107
    %v416 = vunpack.c.l.b16 %v108
    %v417 = vunpack.c.h.b16 %v108
    %v418 = vunpack.c.l.b16 %v109
    %v419 = vunpack.c.h.b16 %v109
    %v420 = vunpack.c.l.b16 %v110
    %v421 = vunpack.c.h.b16 %v110
    %v422 = vunpack.c.l.b16 %v111
    %v423 = vunpack.c.h.b16 %v111
    %v424 = vunpack.c.l.b16 %v112
    %v425 = vunpack.c.h.b16 %v112
    %v426 = vunpack.c.l.b16 %v113
    %v427 = vunpack.c.h.b16 %v113
    %v428 = vunpack.c.l.b16 %v114
    %v429 = vunpack.c.h.b16 %v114
    %v430 = vunpack.c.l.b16 %v115
    %v431 = vunpack.c.h.b16 %v115
    %v432 = vunpack.c.l.b16 %v116
    %v433 = vunpack.c.h.b16 %v116
    %v434 = vunpack.c.l.b16 %v117
    %v435 = vunpack.c.h.b16 %v117
    %v436 = vunpack.c.l.b16 %v118
    %v437 = vunpack.c.h.b16 %v118
    %v438 = vunpack.c.l.b16 %v119
    %v439 = vunpack.c.h.b16 %v119
    %v440 = vunpack.c.l.b16 %v120
    %v441 = vunpack.c.h.b16 %v120
    %v442 = vunpack.c.l.b16 %v121
    %v443 = vunpack.c.h.b16 %v121
    %v444 = vunpack.c.l.b16 %v122
    %v445 = vunpack.c.h.b16 %v122
    %v446 = vunpack.c.l.b16 %v123
    %v447 = vunpack.c.h.b16 %v123
    %v448 = vunpack.c.l.b16 %v124
    %v449 = vunpack.c.h.b16 %v124
    %v450 = vunpack.c.l.b16 %v125
    %v451 = vunpack.c.h.b16 %v125
    %v452 = vunpack.c.l.b16 %v126
    %v453 = vunpack.c.h.b16 %v126
    %v454 = vunpack.c.l.b16 %v127
    %v455 = vunpack.c.h.b16 %v127
    %v456 = vunpack.c.l.b16 %v128
    %v457 = vunpack.c.h.b16 %v128
    %v458 = vunpack.c.l.b16 %v129
    %v459 = vunpack.c.h.b16 %v129
    %v460 = vunpack.c.l.b16 %v130
    %v461 = vunpack.c.h.b16 %v130
    %v462 = vunpack.c.l.b16 %v131
    %v463 = vunpack.c.h.b16 %v131
    %v464 = vunpack.c.l.b16 %v132
    %v465 = vunpack.c.h.b16 %v132
    %v466 = vunpack.c.l.b16 %v133
    %v467 = vunpack.c.h.b16 %v133
    %v468 = vunpack.c.l.b16 %v134
    %v469 = vunpack.c.h.b16 %v134
    %v470 = vunpack.c.l.b16 %v135
    %v471 = vunpack.c.h.b16 %v135
    %v472 = vunpack.c.l.b16 %v136
    %v473 = vunpack.c.h.b16 %v136
    %v474 = vunpack.c.l.b16 %v137
    %v475 = vunpack.c.h.b16 %v137
    %v476 = vunpack.c.l.b16 %v138
    %v477 = vunpack.c.h.b16 %v138
    %v478 = vunpack.c.l.b16 %v139
    %v479 = vunpack.c.h.b16 %v139
    %v480 = vunpack.c.l.b16 %v140
    %v481 = vunpack.c.h.b16 %v140
    %v482 = vunpack.c.l.b16 %v141
    %v483 = vunpack.c.h.b16 %v141
    %v484 = vunpack.c.l.b16 %v142
    %v485 = vunpack.c.h.b16 %v142
    %v486 = vunpack.c.l.b16 %v143
    %v487 = vunpack.c.h.b16 %v143
    %v488 = vunpack.c.l.b16 %v144
    %v489 = vunpack.c.h.b16 %v144
    %v490 = vunpack.c.l.b16 %v145
    %v491 = vunpack.c.h.b16 %v145
    %v492 = vunpack.c.l.b16 %v146
    %v493 = vunpack.c.h.b16 %v146
    %v494 = vunpack.c.l.b16 %v147
    %v495 = vunpack.c.h.b16 %v147
    %v496 = vunpack.c.l.b16 %v148
    %v497 = vunpack.c.h.b16 %v148
    %v498 = vunpack.c.l.b16 %v149
    %v499 = vunpack.c.h.b16 %v149
    %v500 = vunpack.c.l.b16 %v150
    %v501 = vunpack.c.h.b16 %v150
    %v502 = vunpack.c.l.b16 %v151
    %v503 = vunpack.c.h.b16 %v151
    %v504 = vunpack.c.l.b16 %v152
    %v505 = vunpack.c.h.b16 %v152
    %v506 = vunpack.c.l.b16 %v153
    %v507 = vunpack.c.h.b16 %v153
    %v508 = vunpack.c.l.b16 %v154
    %v509 = vunpack.c.h.b16 %v154
    %v510 = vunpack.c.l.b16 %v155
    %v511 = vunpack.c.h.b16 %v155
    %v512 = vunpack.c.l.b16 %v156
    %v513 = vunpack.c.h.b16 %v156
    %v514 = vunpack.c.l.b16 %v157
    %v515 = vunpack.c.h.b16 %v157
    %v516 = vunpack.c.l.b16 %v158
    %v517 = vunpack.c.h.b16 %v158
    %v518 = vunpack.c.l.b16 %v159
    %v519 = vunpack.c.h.b16 %v159
    %v520 = vunpack.c.l.b16 %v160
    %v521 = vunpack.c.h.b16 %v160
    %v522 = vunpack.c.l.b16 %v161
    %v523 = vunpack.c.h.b16 %v161
    %v524 = vunpack.c.l.b16 %v162
    %v525 = vunpack.c.h.b16 %v162
    %v526 = vunpack.c.l.b16 %v163
    %v527 = vunpack.c.h.b16 %v163
    %v528 = vunpack.c.l.b16 %v164
    %v529 = vunpack.c.h.b16 %v164
    %v530 = vunpack.c.l.b16 %v165
    %v531 = vunpack.c.h.b16 %v165
    %v532 = vunpack.c.l.b16 %v166
    %v533 = vunpack.c.h.b16 %v166
    %v534 = vunpack.c.l.b16 %v167
    %v535 = vunpack.c.h.b16 %v167
    %v536 = vunpack.c.l.b16 %v168
    %v537 = vunpack.c.h.b16 %v168
    %v538 = vunpack.c.l.b16 %v169
    %v539 = vunpack.c.h.b16 %v169
    %v540 = vunpack.c.l.b16 %v170
    %v541 = vunpack.c.h.b16 %v170
    %v542 = vunpack.c.l.b16 %v171
    %v543 = vunpack.c.h.b16 %v171
    %v544 = vunpack.c.l.b16 %v172
    %v545 = vunpack.c.h.b16 %v172
    %v546 = vunpack.c.l.b16 %v173
    %v547 = vunpack.c.h.b16 %v173
    %v548 = vunpack.c.l.b16 %v174
    %v549 = vunpack.c.h.b16 %v174
    %v550 = vunpack.c.l.b16 %v175
    %v551 = vunpack.c.h.b16 %v175
    %v552 = vunpack.c.l.b16 %v176
    %v553 = vunpack.c.h.b16 %v176
    %v554 = vunpack.c.l.b16 %v177
    %v555 = vunpack.c.h.b16 %v177
    %v556 = vunpack.c.l.b16 %v178
    %v557 = vunpack.c.h.b16 %v178
    %v558 = vunpack.c.l.b16 %v179
    %v559 = vunpack.c.h.b16 %v179
    %v560 = vunpack.c.l.b16 %v180
    %v561 = vunpack.c.h.b16 %v180
    %v562 = vunpack.c.l.b16 %v181
    %v563 = vunpack.c.h.b16 %v181
    %v564 = vunpack.c.l.b16 %v182
    %v565 = vunpack.c.h.b16 %v182
    %v566 = vunpack.c.l.b16 %v183
    %v567 = vunpack.c.h.b16 %v183
    %v568 = vunpack.c.l.b16 %v184
    %v569 = vunpack.c.h.b16 %v184
    %v570 = vunpack.c.l.b16 %v185
    %v571 = vunpack.c.h.b16 %v185
    %v572 = vunpack.c.l.b16 %v186
    %v573 = vunpack.c.h.b16 %v186
    %v574 = vunpack.c.l.b16 %v187
    %v575 = vunpack.c.h.b16 %v187
    %v576 = vunpack.c.l.b16 %v188
    %v577 = vunpack.c.h.b16 %v188
    %v578 = vunpack.c.l.b16 %v189
    %v579 = vunpack.c.h.b16 %v189
    %v580 = vunpack.c.l.b16 %v190
    %v581 = vunpack.c.h.b16 %v190
    %v582 = vunpack.c.l.b16 %v191
    %v583 = vunpack.c.h.b16 %v191
    %v584 = vunpack.c.l.b16 %v192
    %v585 = vunpack.c.h.b16 %v192
    %v586 = vunpack.c.l.b16 %v193
    %v587 = vunpack.c.h.b16 %v193
    %v588 = vpack.c.b16 %v336, %v332
    %v589 = vpack.c.b16 %v337, %v333
    %v590 = vpack.c.b16 %v338, %v334
    %v591 = vpack.c.b16 %v339, %v335
    %v592 = vpack.c.b16 %v344, %v340
    %v593 = vpack.c.b16 %v345, %v341
    %v594 = vpack.c.b16 %v346, %v342
    %v595 = vpack.c.b16 %v347, %v343
    %v596 = vpack.c.b16 %v352, %v348
    %v597 = vpack.c.b16 %v353, %v349
    %v598 = vpack.c.b16 %v354, %v350
    %v599 = vpack.c.b16 %v355, %v351
    %v600 = vpack.c.b16 %v360, %v356
    %v601 = vpack.c.b16 %v361, %v357
    %v602 = vpack.c.b16 %v362, %v358
    %v603 = vpack.c.b16 %v363, %v359
    %v604 = vpack.c.b16 %v368, %v364
    %v605 = vpack.c.b16 %v369, %v365
    %v606 = vpack.c.b16 %v370, %v366
    %v607 = vpack.c.b16 %v371, %v367
    %v608 = vpack.c.b16 %v376, %v372
    %v609 = vpack.c.b16 %v377, %v373
    %v610 = vpack.c.b16 %v378, %v374
    %v611 = vpack.c.b16 %v379, %v375
    %v612 = vpack.c.b16 %v384, %v380
    %v613 = vpack.c.b16 %v385, %v381
    %v614 = vpack.c.b16 %v386, %v382
    %v615 = vpack.c.b16 %v387, %v383
    %v616 = vpack.c.b16 %v392, %v388
    %v617 = vpack.c.b16 %v393, %v389
    %v618 = vpack.c.b16 %v394, %v390
    %v619 = vpack.c.b16 %v395, %v391
    %v620 = vpack.c.b16 %v400, %v396
    %v621 = vpack.c.b16 %v401, %v397
    %v622 = vpack.c.b16 %v402, %v398
    %v623 = vpack.c.b16 %v403, %v399
    %v624 = vpack.c.b16 %v408, %v404
    %v625 = vpack.c.b16 %v409, %v405
    %v626 = vpack.c.b16 %v410, %v406
    %v627 = vpack.c.b16 %v411, %v407
    %v628 = vpack.c.b16 %v416, %v412
    %v629 = vpack.c.b16 %v417, %v413
    %v630 = vpack.c.b16 %v418, %v414
    %v631 = vpack.c.b16 %v419, %v415
    %v632 = vpack.c.b16 %v424, %v420
    %v633 = vpack.c.b16 %v425, %v421
    %v634 = vpack.c.b16 %v426, %v422
    %v635 = vpack.c.b16 %v427, %v423
    %v636 = vpack.c.b16 %v432, %v428
    %v637 = vpack.c.b16 %v433, %v429
    %v638 = vpack.c.b16 %v434, %v430
    %v639 = vpack.c.b16 %v435, %v431
    %v640 = vpack.c.b16 %v440, %v436
    %v641 = vpack.c.b16 %v441, %v437
    %v642 = vpack.c.b16 %v442, %v438
    %v643 = vpack.c.b16 %v443, %v439
    %v644 = vpack.c.b16 %v448, %v444
    %v645 = vpack.c.b16 %v449, %v445
    %v646 = vpack.c.b16 %v450, %v446
    %v647 = vpack.c.b16 %v451, %v447
    %v648 = vpack.c.b16 %v456, %v452
    %v649 = vpack.c.b16 %v457, %v453
    %v650 = vpack.c.b16 %v458, %v454
    %v651 = vpack.c.b16 %v459, %v455
    %v652 = vpack.c.b16 %v464, %v460
    %v653 = vpack.c.b16 %v465, %v461
    %v654 = vpack.c.b16 %v466, %v462
    %v655 = vpack.c.b16 %v467, %v463
    %v656 = vpack.c.b16 %v472, %v468
    %v657 = vpack.c.b16 %v473, %v469
    %v658 = vpack.c.b16 %v474, %v470
    %v659 = vpack.c.b16 %v475, %v471
    %v660 = vpack.c.b16 %v480, %v476
    %v661 = vpack.c.b16 %v481, %v477
    %v662 = vpack.c.b16 %v482, %v478
    %v663 = vpack.c.b16 %v483, %v479
    %v664 = vpack.c.b16 %v488, %v484
    %v665 = vpack.c.b16 %v489, %v485
    %v666 = vpack.c.b16 %v490, %v486
    %v667 = vpack.c.b16 %v491, %v487
    %v668 = vpack.c.b16 %v496, %v492
    %v669 = vpack.c.b16 %v497, %v493
    %v670 = vpack.c.b16 %v498, %v494
    %v671 = vpack.c.b16 %v499, %v495
    %v672 = vpack.c.b16 %v504, %v500
    %v673 = vpack.c.b16 %v505, %v501
    %v674 = vpack.c.b16 %v506, %v502
    %v675 = vpack.c.b16 %v507, %v503
    %v676 = vpack.c.b16 %v512, %v508
    %v677 = vpack.c.b16 %v513, %v509
    %v678 = vpack.c.b16 %v514, %v510
    %v679 = vpack.c.b16 %v515, %v511
    %v680 = vpack.c.b16 %v520, %v516
    %v681 = vpack.c.b16 %v521, %v517
    %v682 = vpack.c.b16 %v522, %v518
    %v683 = vpack.c.b16 %v523, %v519
    %v684 = vpack.c.b16 %v528, %v524
    %v685 = vpack.c.b16 %v529, %v525
    %v686 = vpack.c.b16 %v530, %v526
    %v687 = vpack.c.b16 %v531, %v527
    %v688 = vpack.c.b16 %v536, %v532
    %v689 = vpack.c.b16 %v537, %v533
    %v690 = vpack.c.b16 %v538, %v534
    %v691 = vpack.c.b16 %v539, %v535
    %v692 = vpack.c.b16 %v544, %v540
    %v693 = vpack.c.b16 %v545, %v541
    %v694 = vpack.c.b16 %v546, %v542
    %v695 = vpack.c.b16 %v547, %v543
    %v696 = vpack.c.b16 %v552, %v548
    %v697 = vpack.c.b16 %v553, %v549
    %v698 = vpack.c.b16 %v554, %v550
    %v699 = vpack.c.b16 %v555, %v551
    %v700 = vpack.c.b16 %v560, %v556
    %v701 = vpack.c.b16 %v561, %v557
    %v702 = vpack.c.b16 %v562, %v558
    %v703 = vpack.c.b16 %v563, %v559
    %v704 = vpack.c.b16 %v568, %v564
    %v705 = vpack.c.b16 %v569, %v565
    %v706 = vpack.c.b16 %v570, %v566
    %v707 = vpack.c.b16 %v571, %v567
    %v708 = vpack.c.b16 %v576, %v572
    %v709 = vpack.c.b16 %v577, %v573
    %v710 = vpack.c.b16 %v578, %v574
    %v711 = vpack.c.b16 %v579, %v575
    %v712 = vpack.c.b16 %v584, %v580
    %v713 = vpack.c.b16 %v585, %v581
    %v714 = vpack.c.b16 %v586, %v582
    %v715 = vpack.c.b16 %v587, %v583
    %844 = vmatpush.bf16.msra.mxu0 %v616
    %845 = vmatpush.bf16.msra.mxu0 %v612
    %846 = vmatpush.bf16.msra.mxu0 %v608
    %847 = vmatpush.bf16.msra.mxu0 %v604
    %848 = vmatpush.bf16.msra.mxu0 %v600
    %849 = vmatpush.bf16.msra.mxu0 %v596
    %850 = vmatpush.bf16.msra.mxu0 %v592
    %851 = vmatpush.bf16.msra.mxu0 %v588
    %852 = vmatmul.bf16.gmra.mxu0 %v62
    %v853 = vpop.f32.mrf.mxu0
    %v854 = vadd.f32 %v196, %v853
    %v855 = vpop.f32.mrf.mxu0
    %856 = vdwg.mxu0
    %857 = vmatpush.bf16.msra.mxu0 %v648
    %858 = vmatpush.bf16.msra.mxu0 %v644
    %859 = vmatpush.bf16.msra.mxu0 %v640
    %860 = vmatpush.bf16.msra.mxu0 %v636
    %861 = vmatpush.bf16.msra.mxu0 %v632
    %862 = vmatpush.bf16.msra.mxu0 %v628
    %863 = vmatpush.bf16.msra.mxu0 %v624
    %864 = vmatpush.bf16.msra.mxu0 %v620
    %865 = vmatmul.bf16.gmra.mxu0 %v63
    %v866 = vpop.f32.mrf.mxu0
    %v867 = vadd.f32 %v854, %v866
    %v868 = vpop.f32.mrf.mxu0
    %869 = vdwg.mxu0
    %870 = vmatpush.bf16.msra.mxu0 %v680
    %871 = vmatpush.bf16.msra.mxu0 %v676
    %872 = vmatpush.bf16.msra.mxu0 %v672
    %873 = vmatpush.bf16.msra.mxu0 %v668
    %874 = vmatpush.bf16.msra.mxu0 %v664
    %875 = vmatpush.bf16.msra.mxu0 %v660
    %876 = vmatpush.bf16.msra.mxu0 %v656
    %877 = vmatpush.bf16.msra.mxu0 %v652
    %878 = vmatmul.bf16.gmra.mxu0 %v64
    %v879 = vpop.f32.mrf.mxu0
    %v880 = vadd.f32 %v867, %v879
    %v881 = vpop.f32.mrf.mxu0
    %882 = vdwg.mxu0
    %883 = vmatpush.bf16.msra.mxu0 %v712
    %884 = vmatpush.bf16.msra.mxu0 %v708
    %885 = vmatpush.bf16.msra.mxu0 %v704
    %886 = vmatpush.bf16.msra.mxu0 %v700
    %887 = vmatpush.bf16.msra.mxu0 %v696
    %888 = vmatpush.bf16.msra.mxu0 %v692
    %889 = vmatpush.bf16.msra.mxu0 %v688
    %890 = vmatpush.bf16.msra.mxu0 %v684
    %891 = vmatmul.bf16.gmra.mxu0 %v65
    %v892 = vpop.f32.mrf.mxu0
    %v893 = vadd.f32 %v880, %v892
    %v894 = vpop.f32.mrf.mxu0
    %895 = vdwg.mxu0
    %896 = vmatpush.bf16.msra.mxu0 %v617
    %897 = vmatpush.bf16.msra.mxu0 %v613
    %898 = vmatpush.bf16.msra.mxu0 %v609
    %899 = vmatpush.bf16.msra.mxu0 %v605
    %900 = vmatpush.bf16.msra.mxu0 %v601
    %901 = vmatpush.bf16.msra.mxu0 %v597
    %902 = vmatpush.bf16.msra.mxu0 %v593
    %903 = vmatpush.bf16.msra.mxu0 %v589
    %904 = vmatmul.bf16.gmra.mxu0 %v62
    %v905 = vpop.f32.mrf.mxu0
    %v906 = vadd.f32 %v197, %v905
    %v907 = vpop.f32.mrf.mxu0
    %908 = vdwg.mxu0
    %909 = vmatpush.bf16.msra.mxu0 %v649
    %910 = vmatpush.bf16.msra.mxu0 %v645
    %911 = vmatpush.bf16.msra.mxu0 %v641
    %912 = vmatpush.bf16.msra.mxu0 %v637
    %913 = vmatpush.bf16.msra.mxu0 %v633
    %914 = vmatpush.bf16.msra.mxu0 %v629
    %915 = vmatpush.bf16.msra.mxu0 %v625
    %916 = vmatpush.bf16.msra.mxu0 %v621
    %917 = vmatmul.bf16.gmra.mxu0 %v63
    %v918 = vpop.f32.mrf.mxu0
    %v919 = vadd.f32 %v906, %v918
    %v920 = vpop.f32.mrf.mxu0
    %921 = vdwg.mxu0
    %922 = vmatpush.bf16.msra.mxu0 %v681
    %923 = vmatpush.bf16.msra.mxu0 %v677
    %924 = vmatpush.bf16.msra.mxu0 %v673
    %925 = vmatpush.bf16.msra.mxu0 %v669
    %926 = vmatpush.bf16.msra.mxu0 %v665
    %927 = vmatpush.bf16.msra.mxu0 %v661
    %928 = vmatpush.bf16.msra.mxu0 %v657
    %929 = vmatpush.bf16.msra.mxu0 %v653
    %930 = vmatmul.bf16.gmra.mxu0 %v64
    %v931 = vpop.f32.mrf.mxu0
    %v932 = vadd.f32 %v919, %v931
    %v933 = vpop.f32.mrf.mxu0
    %934 = vdwg.mxu0
    %935 = vmatpush.bf16.msra.mxu0 %v713
    %936 = vmatpush.bf16.msra.mxu0 %v709
    %937 = vmatpush.bf16.msra.mxu0 %v705
    %938 = vmatpush.bf16.msra.mxu0 %v701
    %939 = vmatpush.bf16.msra.mxu0 %v697
    %940 = vmatpush.bf16.msra.mxu0 %v693
    %941 = vmatpush.bf16.msra.mxu0 %v689
    %942 = vmatpush.bf16.msra.mxu0 %v685
    %943 = vmatmul.bf16.gmra.mxu0 %v65
    %v944 = vpop.f32.mrf.mxu0
    %v945 = vadd.f32 %v932, %v944
    %v946 = vpop.f32.mrf.mxu0
    %947 = vdwg.mxu0
    %948 = vmatpush.bf16.msra.mxu0 %v618
    %949 = vmatpush.bf16.msra.mxu0 %v614
    %950 = vmatpush.bf16.msra.mxu0 %v610
    %951 = vmatpush.bf16.msra.mxu0 %v606
    %952 = vmatpush.bf16.msra.mxu0 %v602
    %953 = vmatpush.bf16.msra.mxu0 %v598
    %954 = vmatpush.bf16.msra.mxu0 %v594
    %955 = vmatpush.bf16.msra.mxu0 %v590
    %956 = vmatmul.bf16.gmra.mxu0 %v62
    %v957 = vpop.f32.mrf.mxu0
    %v958 = vadd.f32 %v198, %v957
    %v959 = vpop.f32.mrf.mxu0
    %960 = vdwg.mxu0
    %961 = vmatpush.bf16.msra.mxu0 %v650
    %962 = vmatpush.bf16.msra.mxu0 %v646
    %963 = vmatpush.bf16.msra.mxu0 %v642
    %964 = vmatpush.bf16.msra.mxu0 %v638
    %965 = vmatpush.bf16.msra.mxu0 %v634
    %966 = vmatpush.bf16.msra.mxu0 %v630
    %967 = vmatpush.bf16.msra.mxu0 %v626
    %968 = vmatpush.bf16.msra.mxu0 %v622
    %969 = vmatmul.bf16.gmra.mxu0 %v63
    %v970 = vpop.f32.mrf.mxu0
    %v971 = vadd.f32 %v958, %v970
    %v972 = vpop.f32.mrf.mxu0
    %973 = vdwg.mxu0
    %974 = vmatpush.bf16.msra.mxu0 %v682
    %975 = vmatpush.bf16.msra.mxu0 %v678
    %976 = vmatpush.bf16.msra.mxu0 %v674
    %977 = vmatpush.bf16.msra.mxu0 %v670
    %978 = vmatpush.bf16.msra.mxu0 %v666
    %979 = vmatpush.bf16.msra.mxu0 %v662
    %980 = vmatpush.bf16.msra.mxu0 %v658
    %981 = vmatpush.bf16.msra.mxu0 %v654
    %982 = vmatmul.bf16.gmra.mxu0 %v64
    %v983 = vpop.f32.mrf.mxu0
    %v984 = vadd.f32 %v971, %v983
    %v985 = vpop.f32.mrf.mxu0
    %986 = vdwg.mxu0
    %987 = vmatpush.bf16.msra.mxu0 %v714
    %988 = vmatpush.bf16.msra.mxu0 %v710
    %989 = vmatpush.bf16.msra.mxu0 %v706
    %990 = vmatpush.bf16.msra.mxu0 %v702
    %991 = vmatpush.bf16.msra.mxu0 %v698
    %992 = vmatpush.bf16.msra.mxu0 %v694
    %993 = vmatpush.bf16.msra.mxu0 %v690
    %994 = vmatpush.bf16.msra.mxu0 %v686
    %995 = vmatmul.bf16.gmra.mxu0 %v65
    %v996 = vpop.f32.mrf.mxu0
    %v997 = vadd.f32 %v984, %v996
    %v998 = vpop.f32.mrf.mxu0
    %999 = vdwg.mxu0
    %1000 = vmatpush.bf16.msra.mxu0 %v619
    %1001 = vmatpush.bf16.msra.mxu0 %v615
    %1002 = vmatpush.bf16.msra.mxu0 %v611
    %1003 = vmatpush.bf16.msra.mxu0 %v607
    %1004 = vmatpush.bf16.msra.mxu0 %v603
    %1005 = vmatpush.bf16.msra.mxu0 %v599
    %1006 = vmatpush.bf16.msra.mxu0 %v595
    %1007 = vmatpush.bf16.msra.mxu0 %v591
    %1008 = vmatmul.bf16.gmra.mxu0 %v62
    %v1009 = vpop.f32.mrf.mxu0
    %v1010 = vadd.f32 %v199, %v1009
    %v1011 = vpop.f32.mrf.mxu0
    %1012 = vdwg.mxu0
    %1013 = vmatpush.bf16.msra.mxu0 %v651
    %1014 = vmatpush.bf16.msra.mxu0 %v647
    %1015 = vmatpush.bf16.msra.mxu0 %v643
    %1016 = vmatpush.bf16.msra.mxu0 %v639
    %1017 = vmatpush.bf16.msra.mxu0 %v635
    %1018 = vmatpush.bf16.msra.mxu0 %v631
    %1019 = vmatpush.bf16.msra.mxu0 %v627
    %1020 = vmatpush.bf16.msra.mxu0 %v623
    %1021 = vmatmul.bf16.gmra.mxu0 %v63
    %v1022 = vpop.f32.mrf.mxu0
    %v1023 = vadd.f32 %v1010, %v1022
    %v1024 = vpop.f32.mrf.mxu0
    %1025 = vdwg.mxu0
    %1026 = vmatpush.bf16.msra.mxu0 %v683
    %1027 = vmatpush.bf16.msra.mxu0 %v679
    %1028 = vmatpush.bf16.msra.mxu0 %v675
    %1029 = vmatpush.bf16.msra.mxu0 %v671
    %1030 = vmatpush.bf16.msra.mxu0 %v667
    %1031 = vmatpush.bf16.msra.mxu0 %v663
    %1032 = vmatpush.bf16.msra.mxu0 %v659
    %1033 = vmatpush.bf16.msra.mxu0 %v655
    %1034 = vmatmul.bf16.gmra.mxu0 %v64
    %v1035 = vpop.f32.mrf.mxu0
    %v1036 = vadd.f32 %v1023, %v1035
    %v1037 = vpop.f32.mrf.mxu0
    %1038 = vdwg.mxu0
    %1039 = vmatpush.bf16.msra.mxu0 %v715
    %1040 = vmatpush.bf16.msra.mxu0 %v711
    %1041 = vmatpush.bf16.msra.mxu0 %v707
    %1042 = vmatpush.bf16.msra.mxu0 %v703
    %1043 = vmatpush.bf16.msra.mxu0 %v699
    %1044 = vmatpush.bf16.msra.mxu0 %v695
    %1045 = vmatpush.bf16.msra.mxu0 %v691
    %1046 = vmatpush.bf16.msra.mxu0 %v687
    %1047 = vmatmul.bf16.gmra.mxu0 %v65
    %v1048 = vpop.f32.mrf.mxu0
    %v1049 = vadd.f32 %v1036, %v1048
    %v1050 = vpop.f32.mrf.mxu0
    %1051 = vdwg.mxu0
    %1052 = vst [vmem:[#allocation8] sm:$0xff] %v893
    %1053 = vst [vmem:[#allocation8 + $0x8] sm:$0xff] %v945
    %1054 = vst [vmem:[#allocation8 + $0x10] sm:$0xff] %v997
    %1055 = vst [vmem:[#allocation8 + $0x18] sm:$0xff] %v1049
    // Predicated region
    $region26: #{fc_forward.1} parent=1 // pred_check
      _
    $region27: #{fc_forward.1} parent=1 // pred_check_branch
      %1057 = sbr.rel (0) target = $region29
    $region28: #{fc_forward.1} parent=1 // pred_region
      %1059 = vsyncadd [#allocation4], 0
      %s1061 = sshll.u32 [#allocation8], 4
      %s1062 = int_to_ptr.vmem [resolvable:$true] %s1061
      %s1063 = sshll.u32 %s3, 4
      %s1064 = int_to_ptr.hbm [resolvable:$true] %s1063
      %1066 = dma.vmem_to_hbm [thread:$0]  %s1062, 512, %s1064, [#allocation4]
    $region29: #{fc_forward.1} parent=1 // pred_fallthru
      _
    // Predicated region
    $region30: #{fc_forward.1} parent=1 // pred_check
      _
    $region31: #{fc_forward.1} parent=1 // pred_check_branch
      %1068 = sbr.rel (0) target = $region33
    $region32: #{fc_forward.1} parent=1 // pred_region
      %1070 = dma.done [#allocation4], 512
    $region33: #{fc_forward.1} parent=1 // pred_fallthru
      _
    %1071 = vsyncpa [#allocation3], 1
    %1072 = vsyncpa [#allocation6], 1
    %1073 = vsyncpa [#allocation4], 1

</llo_original>
